<compile_context>
chip_gen: v7x
topology: tpu7x:2x2x1
jax: 0.10.0
libtpu: 0.0.40
codegen_flags: <defaults>
</compile_context>

<pallas_src>
import math
from functools import partial

import numpy as np
import jax
import jax.numpy as jnp
from jax import lax
from jax.experimental import pallas as pl
from jax.experimental.pallas import tpu as pltpu

# ---- small synthetic PhiConfig -------------------------------------------------
HIDDEN = 32
NUM_HEADS = 4
HEAD_DIM = HIDDEN // NUM_HEADS            # 8
NUM_KV_HEADS = 2                          # GQA
KV_GROUPS = NUM_HEADS // NUM_KV_HEADS     # 2
PARTIAL_ROTARY = 0.5
ROT_DIM = int(PARTIAL_ROTARY * HEAD_DIM)  # 4
ROPE_THETA = 10000.0
BATCH = 2
SEQ = 8

QW = NUM_HEADS * HEAD_DIM                 # 32
KVW = NUM_KV_HEADS * HEAD_DIM             # 16
FUSED_W = QW + 2 * KVW + QW + KVW         # 112 lanes: [q | k | v | q_rot | k_rot]


# ---- fused Pallas kernel --------------------------------------------------------
def _phi_attn_fused_kernel(x_ref, wqkv_ref, bqkv_ref, wd_ref, bd_ref,
                           cosq_ref, sinq_ref, bias_ref, o_ref, attn_scr,
                           *, batch, seq, n_heads, n_kv_heads, head_dim):
    qw = n_heads * head_dim
    kvw = n_kv_heads * head_dim

    # ---- fused Q/K/V (+ pre-rotated Q/K) projection: ONE MXU push ----
    qkv = jnp.dot(x_ref[...], wqkv_ref[...],
                  preferred_element_type=jnp.float32) + bqkv_ref[...]
    q     = qkv[:, :qw]                            # already scaled by 1/sqrt(d)
    k     = qkv[:, qw:qw + kvw]
    v     = qkv[:, qw + kvw:qw + 2 * kvw]
    q_rot = qkv[:, qw + 2 * kvw:2 * qw + 2 * kvw]  # rotate_half(q) * scale
    k_rot = qkv[:, 2 * qw + 2 * kvw:]              # rotate_half(k)

    # ---- partial RoPE: pure mul-add (rotation matmul folded into the weights) ----
    cos = cosq_ref[...]
    sin = sinq_ref[...]
    q = q * cos + q_rot * sin
    k = k * cos[:, :kvw] + k_rot * sin[:, :kvw]    # K factors == first KVW Q lanes

    # ---- relayout: Q head-major, K/V kv-head-major (GQA never repeated) ----
    q_blks, k_blks, v_blks = [], [], []
    for b in range(batch):
        r0 = b * seq
        for h in range(n_heads):
            q_blks.append(q[r0:r0 + seq, h * head_dim:(h + 1) * head_dim])
        for g in range(n_kv_heads):
            k_blks.append(k[r0:r0 + seq, g * head_dim:(g + 1) * head_dim])
            v_blks.append(v[r0:r0 + seq, g * head_dim:(g + 1) * head_dim])
    q_h  = jnp.concatenate(q_blks, axis=0)         # (B*NH*S,  D)
    k_kv = jnp.concatenate(k_blks, axis=0)         # (B*NKV*S, D)
    v_kv = jnp.concatenate(v_blks, axis=0)         # (B*NKV*S, D)

    # ---- all (batch, head) scores in ONE matmul + block-diagonal bias ----
    s = lax.dot_general(q_h, k_kv, (((1,), (1,)), ((), ())),
                        preferred_element_type=jnp.float32)   # (B*NH*S, B*NKV*S)
    s = s + bias_ref[...]                          # -1e30 outside own (b, h//G) block
    s = s - jnp.max(s, axis=-1, keepdims=True)
    p = jnp.exp(s)
    p = p / jnp.sum(p, axis=-1, keepdims=True)     # exact softmax in f32

    # ---- P @ V in ONE matmul (off-block probabilities are exactly 0) ----
    attn_h = jnp.dot(p, v_kv, preferred_element_type=jnp.float32)   # (B*NH*S, D)

    # ---- reassemble head-major -> token-major via static stores into scratch ----
    for b in range(batch):
        for h in range(n_heads):
            blk = (b * n_heads + h) * seq
            attn_scr[b * seq:(b + 1) * seq, h * head_dim:(h + 1) * head_dim] = \
                attn_h[blk:blk + seq, :]

    # ---- output projection ----
    out = jnp.dot(attn_scr[...], wd_ref[...],
                  preferred_element_type=jnp.float32) + bd_ref[...]
    o_ref[...] = out.astype(o_ref.dtype)


# ---- RoPE tables (analogous to torch cos_cached / sin_cached buffers) ----------
def rope_cos_sin(seq_len):
    inv_freq = 1.0 / (ROPE_THETA ** (
        jnp.arange(0, ROT_DIM, 2, dtype=jnp.float32) / ROT_DIM))
    t = jnp.arange(seq_len, dtype=jnp.float32)
    freqs = jnp.outer(t, inv_freq)
    emb = jnp.concatenate([freqs, freqs], axis=-1)          # (S, ROT_DIM)
    return jnp.cos(emb), jnp.sin(emb)


def build_rope_factors(position_ids, seq_len, dtype):
    """Per-token cos/sin over the full Q lane width (pass dims: cos=1, sin=0).
    The first KVW lanes double as the K factors (the kernel slices them)."""
    cos, sin = rope_cos_sin(seq_len)
    cos = cos[position_ids]                                  # (B, S, ROT)
    sin = sin[position_ids]
    pad_c = jnp.ones(position_ids.shape + (HEAD_DIM - ROT_DIM,), jnp.float32)
    pad_s = jnp.zeros_like(pad_c)
    cos_h = jnp.concatenate([cos, pad_c], axis=-1)           # (B, S, D)
    sin_h = jnp.concatenate([sin, pad_s], axis=-1)
    B, S = position_ids.shape
    cos_q = jnp.tile(cos_h, (1, 1, NUM_HEADS)).reshape(B * S, QW)
    sin_q = jnp.tile(sin_h, (1, 1, NUM_HEADS)).reshape(B * S, QW)
    return cos_q.astype(dtype), sin_q.astype(dtype)


# ---- one-time weight preparation (outside the jitted forward) -------------------
def build_rotate_mats():
    """Block-diagonal rotate_half permutation (with sign) for Q and K widths."""
    half = ROT_DIM // 2
    r_head = np.zeros((HEAD_DIM, HEAD_DIM), np.float32)
    for j in range(half):
        r_head[j + half, j] = -1.0   # out[:, j]      = -x[:, j+half]
        r_head[j, j + half] = 1.0    # out[:, j+half] =  x[:, j]
    r_q = np.kron(np.eye(NUM_HEADS, dtype=np.float32), r_head)
    r_k = np.kron(np.eye(NUM_KV_HEADS, dtype=np.float32), r_head)
    return jnp.asarray(r_q), jnp.asarray(r_k)


def prepare_params(raw):
    """Fuse Q/K/V weights, fold rotate_half and 1/sqrt(head_dim) into them."""
    scale = 1.0 / math.sqrt(HEAD_DIM)
    r_q, r_k = build_rotate_mats()
    wq_s = raw["wq_t"] * scale
    bq_s = raw["bq"] * scale
    wqkv = jnp.concatenate(
        [wq_s, raw["wk_t"], raw["wv_t"], wq_s @ r_q, raw["wk_t"] @ r_k], axis=1)
    bqkv = jnp.concatenate(
        [bq_s, raw["bk"], raw["bv"], bq_s @ r_q, raw["bk"] @ r_k], axis=1)
    assert wqkv.shape == (HIDDEN, FUSED_W)
    return {"wqkv": wqkv, "bqkv": bqkv, "wd_t": raw["wd_t"], "bd": raw["bd"]}


def build_block_bias(batch, seq):
    """Additive -1e30 bias masking score lanes outside each (b,h)->(b,h//G) block."""
    rows = batch * NUM_HEADS * seq
    cols = batch * NUM_KV_HEADS * seq
    bias = np.full((rows, cols), -1e30, np.float32)
    for b in range(batch):
        for h in range(NUM_HEADS):
            r0 = (b * NUM_HEADS + h) * seq
            c0 = (b * NUM_KV_HEADS + h // KV_GROUPS) * seq
            bias[r0:r0 + seq, c0:c0 + seq] = 0.0
    return jnp.asarray(bias)


# ---- full PhiAttention forward (one gridless pallas_call) -----------------------
@jax.jit
def phi_attention_forward(prep, hidden_states, position_ids):
    B, S, H = hidden_states.shape
    M = B * S
    x2d = hidden_states.reshape(M, H)
    cos_q, sin_q = build_rope_factors(position_ids, S, hidden_states.dtype)
    bias = build_block_bias(B, S)    # compile-time constant (static B, S)

    kernel = partial(_phi_attn_fused_kernel, batch=B, seq=S,
                     n_heads=NUM_HEADS, n_kv_heads=NUM_KV_HEADS,
                     head_dim=HEAD_DIM)

    # No grid: a single invocation with every operand resident in VMEM (a few KiB),
    # so no double-buffering overhead from a 1-step pipeline.
    out2d = pl.pallas_call(
        kernel,
        out_shape=jax.ShapeDtypeStruct((M, H), hidden_states.dtype),
        scratch_shapes=[pltpu.VMEM((M, QW), jnp.float32)],
    )(x2d, prep["wqkv"], prep["bqkv"], prep["wd_t"], prep["bd"],
      cos_q, sin_q, bias)
    return out2d.reshape(B, S, H)


# ---- pure-JAX reference for verification ----------------------------------------
def rotate_half(x):
    x1 = x[..., : x.shape[-1] // 2]
    x2 = x[..., x.shape[-1] // 2:]
    return jnp.concatenate([-x2, x1], axis=-1)


def apply_rotary_pos_emb(q, k, cos, sin, position_ids):
    cos = cos[position_ids][:, None, :, :]
    sin = sin[position_ids][:, None, :, :]
    q_embed = q * cos + rotate_half(q) * sin
    k_embed = k * cos + rotate_half(k) * sin
    return q_embed, k_embed


def phi_attention_reference(params, hidden_states, position_ids):
    B, S, H = hidden_states.shape
    x2d = hidden_states.reshape(B * S, H)
    q = x2d @ params["wq_t"] + params["bq"][0]
    k = x2d @ params["wk_t"] + params["bk"][0]
    v = x2d @ params["wv_t"] + params["bv"][0]
    q = q.reshape(B, S, NUM_HEADS, HEAD_DIM).transpose(0, 2, 1, 3)
    k = k.reshape(B, S, NUM_KV_HEADS, HEAD_DIM).transpose(0, 2, 1, 3)
    v = v.reshape(B, S, NUM_KV_HEADS, HEAD_DIM).transpose(0, 2, 1, 3)
    cos, sin = rope_cos_sin(S)
    q_rot, k_rot = apply_rotary_pos_emb(q[..., :ROT_DIM], k[..., :ROT_DIM],
                                        cos, sin, position_ids)
    q = jnp.concatenate([q_rot, q[..., ROT_DIM:]], axis=-1)
    k = jnp.concatenate([k_rot, k[..., ROT_DIM:]], axis=-1)
    k = jnp.repeat(k, KV_GROUPS, axis=1)          # repeat_kv
    v = jnp.repeat(v, KV_GROUPS, axis=1)
    scores = jnp.einsum("bhqd,bhkd->bhqk", q.astype(jnp.float32),
                        k.astype(jnp.float32)) / math.sqrt(HEAD_DIM)
    w = jax.nn.softmax(scores, axis=-1).astype(v.dtype)
    attn = jnp.einsum("bhqk,bhkd->bhqd", w, v)
    attn = attn.transpose(0, 2, 1, 3).reshape(B * S, H)
    out = attn @ params["wd_t"] + params["bd"][0]
    return out.reshape(B, S, H)


# ---- deterministic parameter init ------------------------------------------------
def init_params(key):
    ks = jax.random.split(key, 8)
    std = 0.02
    return {
        "wq_t": std * jax.random.normal(ks[0], (HIDDEN, QW), jnp.float32),
        "bq":   std * jax.random.normal(ks[1], (1, QW), jnp.float32),
        "wk_t": std * jax.random.normal(ks[2], (HIDDEN, KVW), jnp.float32),
        "bk":   std * jax.random.normal(ks[3], (1, KVW), jnp.float32),
        "wv_t": std * jax.random.normal(ks[4], (HIDDEN, KVW), jnp.float32),
        "bv":   std * jax.random.normal(ks[5], (1, KVW), jnp.float32),
        "wd_t": std * jax.random.normal(ks[6], (QW, HIDDEN), jnp.float32),
        "bd":   std * jax.random.normal(ks[7], (1, HIDDEN), jnp.float32),
    }


if __name__ == "__main__":
    key = jax.random.PRNGKey(0)
    pkey, xkey = jax.random.split(key)
    raw_params = init_params(pkey)
    prep = prepare_params(raw_params)          # one-time weight prep, outside jit

    hidden_states = jax.random.normal(xkey, (BATCH, SEQ, HIDDEN), jnp.float32)
    position_ids = jnp.broadcast_to(jnp.arange(SEQ)[None, :], (BATCH, SEQ))

    out = phi_attention_forward(prep, hidden_states, position_ids)
    out = jax.block_until_ready(out)

    ref = phi_attention_reference(raw_params, hidden_states, position_ids)
    assert out.shape == (BATCH, SEQ, HIDDEN)
    err = float(jnp.max(jnp.abs(out - ref)))
    assert err < 2e-4, f"max abs err {err}"

    print("KERNEL_OK")
</pallas_src>

<mosaic_0001>
module attributes {stable_mosaic.version = 11 : i64} {
  func.func @_phi_attn_fused_kernel(%arg0: memref<16x32xf32, #tpu.memory_space<vmem>>, %arg1: memref<32x112xf32, #tpu.memory_space<vmem>>, %arg2: memref<1x112xf32, #tpu.memory_space<vmem>>, %arg3: memref<32x32xf32, #tpu.memory_space<vmem>>, %arg4: memref<1x32xf32, #tpu.memory_space<vmem>>, %arg5: memref<16x32xf32, #tpu.memory_space<vmem>>, %arg6: memref<16x32xf32, #tpu.memory_space<vmem>>, %arg7: memref<64x32xf32, #tpu.memory_space<vmem>>, %arg8: memref<16x32xf32, #tpu.memory_space<vmem>>, %arg9: memref<16x32xf32, #tpu.memory_space<vmem>>) attributes {dimension_semantics = [], scalar_prefetch = 0 : i64, scratch_operands = 1 : i64, tpu.core_type = #tpu.core_type<tc>} {
    %c0 = arith.constant 0 : index
    %c0_0 = arith.constant 0 : index
    %0 = vector.load %arg0[%c0, %c0_0] : memref<16x32xf32, #tpu.memory_space<vmem>>, vector<16x32xf32>
    %c0_1 = arith.constant 0 : index
    %c0_2 = arith.constant 0 : index
    %1 = vector.load %arg1[%c0_1, %c0_2] : memref<32x112xf32, #tpu.memory_space<vmem>>, vector<32x112xf32>
    %cst = arith.constant dense<0.000000e+00> : vector<16x112xf32>
    %2 = tpu.matmul %0, %1, %cst {dimension_numbers = #tpu.dot_dimension_numbers<[1], [0], [0], [1], [0, 0, 1, 1], [], []>} : vector<16x32xf32>, vector<32x112xf32>, vector<16x112xf32> -> vector<16x112xf32>
    %c0_3 = arith.constant 0 : index
    %c0_4 = arith.constant 0 : index
    %3 = vector.load %arg2[%c0_3, %c0_4] : memref<1x112xf32, #tpu.memory_space<vmem>>, vector<1x112xf32>
    %4 = vector.broadcast %3 : vector<1x112xf32> to vector<16x112xf32>
    %5 = arith.addf %2, %4 : vector<16x112xf32>
    %6 = vector.extract_strided_slice %5 {offsets = [0, 0], sizes = [16, 32], strides = [1, 1]} : vector<16x112xf32> to vector<16x32xf32>
    %7 = vector.extract_strided_slice %5 {offsets = [0, 32], sizes = [16, 16], strides = [1, 1]} : vector<16x112xf32> to vector<16x16xf32>
    %8 = vector.extract_strided_slice %5 {offsets = [0, 48], sizes = [16, 16], strides = [1, 1]} : vector<16x112xf32> to vector<16x16xf32>
    %9 = vector.extract_strided_slice %5 {offsets = [0, 64], sizes = [16, 32], strides = [1, 1]} : vector<16x112xf32> to vector<16x32xf32>
    %10 = vector.extract_strided_slice %5 {offsets = [0, 96], sizes = [16, 16], strides = [1, 1]} : vector<16x112xf32> to vector<16x16xf32>
    %c0_5 = arith.constant 0 : index
    %c0_6 = arith.constant 0 : index
    %11 = vector.load %arg5[%c0_5, %c0_6] : memref<16x32xf32, #tpu.memory_space<vmem>>, vector<16x32xf32>
    %c0_7 = arith.constant 0 : index
    %c0_8 = arith.constant 0 : index
    %12 = vector.load %arg6[%c0_7, %c0_8] : memref<16x32xf32, #tpu.memory_space<vmem>>, vector<16x32xf32>
    %13 = arith.mulf %6, %11 : vector<16x32xf32>
    %14 = arith.mulf %9, %12 : vector<16x32xf32>
    %15 = arith.addf %13, %14 : vector<16x32xf32>
    %16 = vector.extract_strided_slice %11 {offsets = [0, 0], sizes = [16, 16], strides = [1, 1]} : vector<16x32xf32> to vector<16x16xf32>
    %17 = arith.mulf %7, %16 : vector<16x16xf32>
    %18 = vector.extract_strided_slice %12 {offsets = [0, 0], sizes = [16, 16], strides = [1, 1]} : vector<16x32xf32> to vector<16x16xf32>
    %19 = arith.mulf %10, %18 : vector<16x16xf32>
    %20 = arith.addf %17, %19 : vector<16x16xf32>
    %21 = vector.extract_strided_slice %15 {offsets = [0, 0], sizes = [8, 8], strides = [1, 1]} : vector<16x32xf32> to vector<8x8xf32>
    %22 = vector.extract_strided_slice %15 {offsets = [0, 8], sizes = [8, 8], strides = [1, 1]} : vector<16x32xf32> to vector<8x8xf32>
    %23 = vector.extract_strided_slice %15 {offsets = [0, 16], sizes = [8, 8], strides = [1, 1]} : vector<16x32xf32> to vector<8x8xf32>
    %24 = vector.extract_strided_slice %15 {offsets = [0, 24], sizes = [8, 8], strides = [1, 1]} : vector<16x32xf32> to vector<8x8xf32>
    %25 = vector.extract_strided_slice %20 {offsets = [0, 0], sizes = [8, 8], strides = [1, 1]} : vector<16x16xf32> to vector<8x8xf32>
    %26 = vector.extract_strided_slice %8 {offsets = [0, 0], sizes = [8, 8], strides = [1, 1]} : vector<16x16xf32> to vector<8x8xf32>
    %27 = vector.extract_strided_slice %20 {offsets = [0, 8], sizes = [8, 8], strides = [1, 1]} : vector<16x16xf32> to vector<8x8xf32>
    %28 = vector.extract_strided_slice %8 {offsets = [0, 8], sizes = [8, 8], strides = [1, 1]} : vector<16x16xf32> to vector<8x8xf32>
    %29 = vector.extract_strided_slice %15 {offsets = [8, 0], sizes = [8, 8], strides = [1, 1]} : vector<16x32xf32> to vector<8x8xf32>
    %30 = vector.extract_strided_slice %15 {offsets = [8, 8], sizes = [8, 8], strides = [1, 1]} : vector<16x32xf32> to vector<8x8xf32>
    %31 = vector.extract_strided_slice %15 {offsets = [8, 16], sizes = [8, 8], strides = [1, 1]} : vector<16x32xf32> to vector<8x8xf32>
    %32 = vector.extract_strided_slice %15 {offsets = [8, 24], sizes = [8, 8], strides = [1, 1]} : vector<16x32xf32> to vector<8x8xf32>
    %33 = vector.extract_strided_slice %20 {offsets = [8, 0], sizes = [8, 8], strides = [1, 1]} : vector<16x16xf32> to vector<8x8xf32>
    %34 = vector.extract_strided_slice %8 {offsets = [8, 0], sizes = [8, 8], strides = [1, 1]} : vector<16x16xf32> to vector<8x8xf32>
    %35 = vector.extract_strided_slice %20 {offsets = [8, 8], sizes = [8, 8], strides = [1, 1]} : vector<16x16xf32> to vector<8x8xf32>
    %36 = vector.extract_strided_slice %8 {offsets = [8, 8], sizes = [8, 8], strides = [1, 1]} : vector<16x16xf32> to vector<8x8xf32>
    %37 = tpu.concatenate %21, %22, %23, %24, %29, %30, %31, %32 in 0 : vector<8x8xf32>, vector<8x8xf32>, vector<8x8xf32>, vector<8x8xf32>, vector<8x8xf32>, vector<8x8xf32>, vector<8x8xf32>, vector<8x8xf32> -> vector<64x8xf32>
    %38 = tpu.concatenate %25, %27, %33, %35 in 0 : vector<8x8xf32>, vector<8x8xf32>, vector<8x8xf32>, vector<8x8xf32> -> vector<32x8xf32>
    %39 = tpu.concatenate %26, %28, %34, %36 in 0 : vector<8x8xf32>, vector<8x8xf32>, vector<8x8xf32>, vector<8x8xf32> -> vector<32x8xf32>
    %cst_9 = arith.constant dense<0.000000e+00> : vector<64x32xf32>
    %40 = tpu.matmul %37, %38, %cst_9 {dimension_numbers = #tpu.dot_dimension_numbers<[1], [1], [0], [0], [0, 0, 1, 0], [], []>} : vector<64x8xf32>, vector<32x8xf32>, vector<64x32xf32> -> vector<64x32xf32>
    %c0_10 = arith.constant 0 : index
    %c0_11 = arith.constant 0 : index
    %41 = vector.load %arg7[%c0_10, %c0_11] : memref<64x32xf32, #tpu.memory_space<vmem>>, vector<64x32xf32>
    %42 = arith.addf %40, %41 : vector<64x32xf32>
    %cst_12 = arith.constant dense<0xFF800000> : vector<64xf32>
    %43 = vector.multi_reduction <maximumf>, %42, %cst_12 [1] : vector<64x32xf32> to vector<64xf32>
    %44 = vector.shape_cast %43 : vector<64xf32> to vector<64x1xf32>
    %45 = vector.broadcast %44 : vector<64x1xf32> to vector<64x32xf32>
    %46 = arith.subf %42, %45 : vector<64x32xf32>
    %47 = math.exp %46 : vector<64x32xf32>
    %cst_13 = arith.constant dense<0.000000e+00> : vector<64xf32>
    %48 = vector.multi_reduction <add>, %47, %cst_13 [1] : vector<64x32xf32> to vector<64xf32>
    %49 = vector.shape_cast %48 : vector<64xf32> to vector<64x1xf32>
    %50 = vector.broadcast %49 : vector<64x1xf32> to vector<64x32xf32>
    %51 = arith.divf %47, %50 : vector<64x32xf32>
    %cst_14 = arith.constant dense<0.000000e+00> : vector<64x8xf32>
    %52 = tpu.matmul %51, %39, %cst_14 {dimension_numbers = #tpu.dot_dimension_numbers<[1], [0], [0], [1], [0, 0, 1, 1], [], []>} : vector<64x32xf32>, vector<32x8xf32>, vector<64x8xf32> -> vector<64x8xf32>
    %53 = vector.extract_strided_slice %52 {offsets = [0, 0], sizes = [8, 8], strides = [1, 1]} : vector<64x8xf32> to vector<8x8xf32>
    %c0_15 = arith.constant 0 : index
    %c0_16 = arith.constant 0 : index
    %54 = vector.load %arg9[%c0_15, %c0_16] : memref<16x32xf32, #tpu.memory_space<vmem>>, vector<8x8xf32>
    tpu.vector_store %arg9[%c0_15, %c0_16], %53 {strides = array<i32>} : memref<16x32xf32, #tpu.memory_space<vmem>>, vector<8x8xf32>,
    %55 = vector.extract_strided_slice %52 {offsets = [8, 0], sizes = [8, 8], strides = [1, 1]} : vector<64x8xf32> to vector<8x8xf32>
    %c0_17 = arith.constant 0 : index
    %c8 = arith.constant 8 : index
    %56 = vector.load %arg9[%c0_17, %c8] : memref<16x32xf32, #tpu.memory_space<vmem>>, vector<8x8xf32>
    tpu.vector_store %arg9[%c0_17, %c8], %55 {strides = array<i32>} : memref<16x32xf32, #tpu.memory_space<vmem>>, vector<8x8xf32>,
    %57 = vector.extract_strided_slice %52 {offsets = [16, 0], sizes = [8, 8], strides = [1, 1]} : vector<64x8xf32> to vector<8x8xf32>
    %c0_18 = arith.constant 0 : index
    %c16 = arith.constant 16 : index
    %58 = vector.load %arg9[%c0_18, %c16] : memref<16x32xf32, #tpu.memory_space<vmem>>, vector<8x8xf32>
    tpu.vector_store %arg9[%c0_18, %c16], %57 {strides = array<i32>} : memref<16x32xf32, #tpu.memory_space<vmem>>, vector<8x8xf32>,
    %59 = vector.extract_strided_slice %52 {offsets = [24, 0], sizes = [8, 8], strides = [1, 1]} : vector<64x8xf32> to vector<8x8xf32>
    %c0_19 = arith.constant 0 : index
    %c24 = arith.constant 24 : index
    %60 = vector.load %arg9[%c0_19, %c24] : memref<16x32xf32, #tpu.memory_space<vmem>>, vector<8x8xf32>
    tpu.vector_store %arg9[%c0_19, %c24], %59 {strides = array<i32>} : memref<16x32xf32, #tpu.memory_space<vmem>>, vector<8x8xf32>,
    %61 = vector.extract_strided_slice %52 {offsets = [32, 0], sizes = [8, 8], strides = [1, 1]} : vector<64x8xf32> to vector<8x8xf32>
    %c8_20 = arith.constant 8 : index
    %c0_21 = arith.constant 0 : index
    %62 = vector.load %arg9[%c8_20, %c0_21] : memref<16x32xf32, #tpu.memory_space<vmem>>, vector<8x8xf32>
    tpu.vector_store %arg9[%c8_20, %c0_21], %61 {strides = array<i32>} : memref<16x32xf32, #tpu.memory_space<vmem>>, vector<8x8xf32>,
    %63 = vector.extract_strided_slice %52 {offsets = [40, 0], sizes = [8, 8], strides = [1, 1]} : vector<64x8xf32> to vector<8x8xf32>
    %c8_22 = arith.constant 8 : index
    %c8_23 = arith.constant 8 : index
    %64 = vector.load %arg9[%c8_22, %c8_23] : memref<16x32xf32, #tpu.memory_space<vmem>>, vector<8x8xf32>
    tpu.vector_store %arg9[%c8_22, %c8_23], %63 {strides = array<i32>} : memref<16x32xf32, #tpu.memory_space<vmem>>, vector<8x8xf32>,
    %65 = vector.extract_strided_slice %52 {offsets = [48, 0], sizes = [8, 8], strides = [1, 1]} : vector<64x8xf32> to vector<8x8xf32>
    %c8_24 = arith.constant 8 : index
    %c16_25 = arith.constant 16 : index
    %66 = vector.load %arg9[%c8_24, %c16_25] : memref<16x32xf32, #tpu.memory_space<vmem>>, vector<8x8xf32>
    tpu.vector_store %arg9[%c8_24, %c16_25], %65 {strides = array<i32>} : memref<16x32xf32, #tpu.memory_space<vmem>>, vector<8x8xf32>,
    %67 = vector.extract_strided_slice %52 {offsets = [56, 0], sizes = [8, 8], strides = [1, 1]} : vector<64x8xf32> to vector<8x8xf32>
    %c8_26 = arith.constant 8 : index
    %c24_27 = arith.constant 24 : index
    %68 = vector.load %arg9[%c8_26, %c24_27] : memref<16x32xf32, #tpu.memory_space<vmem>>, vector<8x8xf32>
    tpu.vector_store %arg9[%c8_26, %c24_27], %67 {strides = array<i32>} : memref<16x32xf32, #tpu.memory_space<vmem>>, vector<8x8xf32>,
    %c0_28 = arith.constant 0 : index
    %c0_29 = arith.constant 0 : index
    %69 = vector.load %arg9[%c0_28, %c0_29] : memref<16x32xf32, #tpu.memory_space<vmem>>, vector<16x32xf32>
    %c0_30 = arith.constant 0 : index
    %c0_31 = arith.constant 0 : index
    %70 = vector.load %arg3[%c0_30, %c0_31] : memref<32x32xf32, #tpu.memory_space<vmem>>, vector<32x32xf32>
    %cst_32 = arith.constant dense<0.000000e+00> : vector<16x32xf32>
    %71 = tpu.matmul %69, %70, %cst_32 {dimension_numbers = #tpu.dot_dimension_numbers<[1], [0], [0], [1], [0, 0, 1, 1], [], []>} : vector<16x32xf32>, vector<32x32xf32>, vector<16x32xf32> -> vector<16x32xf32>
    %c0_33 = arith.constant 0 : index
    %c0_34 = arith.constant 0 : index
    %72 = vector.load %arg4[%c0_33, %c0_34] : memref<1x32xf32, #tpu.memory_space<vmem>>, vector<1x32xf32>
    %73 = vector.broadcast %72 : vector<1x32xf32> to vector<16x32xf32>
    %74 = arith.addf %71, %73 : vector<16x32xf32>
    %c0_35 = arith.constant 0 : index
    %c0_36 = arith.constant 0 : index
    %75 = vector.load %arg8[%c0_35, %c0_36] : memref<16x32xf32, #tpu.memory_space<vmem>>, vector<16x32xf32>
    tpu.vector_store %arg8[%c0_35, %c0_36], %74 {strides = array<i32>} : memref<16x32xf32, #tpu.memory_space<vmem>>, vector<16x32xf32>,
    return
  }
}

</mosaic_0001>

<llo_original>
// kernel: tile.19
$region0: #{tile.19}
  %s0 = inlined_call_operand.vmem [shape: f32[2,1,8,4,8], index: 0, kind: input, shape index: {}]
  %s1 = inlined_call_operand.vmem [shape: f32[16,32], index: 1, kind: output, shape index: {}]
  $region1: #{tile.19} parent=0
    #allocation0 [shape = 'u8[65536]{0}', space=vmem, size = 0x10000, scoped, tag = 'scoped mem for input reshape']
    %s3 = sshllo.u32 0, 4
    %s4 = smul.addr 4, 15
    %s5 = scalar_lea.vmem %s0, %s4
    %v6 = vld [vmem:[%s5] sm:%s3]
    %s7 = scalar_lea.vmem [#allocation0], 120
    %8 = vst [vmem:[%s7] sm:%s3] %v6
    %s9 = smul.addr 4, 14
    %s10 = scalar_lea.vmem %s0, %s9
    %v11 = vld [vmem:[%s10] sm:%s3]
    %s12 = scalar_lea.vmem [#allocation0], 112
    %13 = vst [vmem:[%s12] sm:%s3] %v11
    %s14 = smul.addr 4, 13
    %s15 = scalar_lea.vmem %s0, %s14
    %v16 = vld [vmem:[%s15] sm:%s3]
    %s17 = scalar_lea.vmem [#allocation0], 104
    %18 = vst [vmem:[%s17] sm:%s3] %v16
    %s19 = smul.addr 4, 12
    %s20 = scalar_lea.vmem %s0, %s19
    %v21 = vld [vmem:[%s20] sm:%s3]
    %s22 = scalar_lea.vmem [#allocation0], 96
    %23 = vst [vmem:[%s22] sm:%s3] %v21
    %s24 = smul.addr 4, 11
    %s25 = scalar_lea.vmem %s0, %s24
    %v26 = vld [vmem:[%s25] sm:%s3]
    %s27 = scalar_lea.vmem [#allocation0], 88
    %28 = vst [vmem:[%s27] sm:%s3] %v26
    %s29 = smul.addr 4, 10
    %s30 = scalar_lea.vmem %s0, %s29
    %v31 = vld [vmem:[%s30] sm:%s3]
    %s32 = scalar_lea.vmem [#allocation0], 80
    %33 = vst [vmem:[%s32] sm:%s3] %v31
    %s34 = smul.addr 4, 9
    %s35 = scalar_lea.vmem %s0, %s34
    %v36 = vld [vmem:[%s35] sm:%s3]
    %s37 = scalar_lea.vmem [#allocation0], 72
    %38 = vst [vmem:[%s37] sm:%s3] %v36
    %s39 = smul.addr 4, 8
    %s40 = scalar_lea.vmem %s0, %s39
    %v41 = vld [vmem:[%s40] sm:%s3]
    %s42 = scalar_lea.vmem [#allocation0], 64
    %43 = vst [vmem:[%s42] sm:%s3] %v41
    %s44 = smul.addr 4, 7
    %s45 = scalar_lea.vmem %s0, %s44
    %v46 = vld [vmem:[%s45] sm:%s3]
    %s47 = scalar_lea.vmem [#allocation0], 56
    %48 = vst [vmem:[%s47] sm:%s3] %v46
    %s49 = smul.addr 4, 6
    %s50 = scalar_lea.vmem %s0, %s49
    %v51 = vld [vmem:[%s50] sm:%s3]
    %s52 = scalar_lea.vmem [#allocation0], 48
    %53 = vst [vmem:[%s52] sm:%s3] %v51
    %s54 = smul.addr 4, 5
    %s55 = scalar_lea.vmem %s0, %s54
    %v56 = vld [vmem:[%s55] sm:%s3]
    %s57 = scalar_lea.vmem [#allocation0], 40
    %58 = vst [vmem:[%s57] sm:%s3] %v56
    %s59 = smul.addr 4, 4
    %s60 = scalar_lea.vmem %s0, %s59
    %v61 = vld [vmem:[%s60] sm:%s3]
    %s62 = scalar_lea.vmem [#allocation0], 32
    %63 = vst [vmem:[%s62] sm:%s3] %v61
    %s64 = smul.addr 4, 3
    %s65 = scalar_lea.vmem %s0, %s64
    %v66 = vld [vmem:[%s65] sm:%s3]
    %s67 = scalar_lea.vmem [#allocation0], 24
    %68 = vst [vmem:[%s67] sm:%s3] %v66
    %s69 = smul.addr 4, 2
    %s70 = scalar_lea.vmem %s0, %s69
    %v71 = vld [vmem:[%s70] sm:%s3]
    %s72 = scalar_lea.vmem [#allocation0], 16
    %73 = vst [vmem:[%s72] sm:%s3] %v71
    %s74 = scalar_lea.vmem %s0, 4
    %v75 = vld [vmem:[%s74] sm:%s3]
    %s76 = scalar_lea.vmem [#allocation0], 8
    %77 = vst [vmem:[%s76] sm:%s3] %v75
    %v78 = vld [vmem:[%s0] sm:%s3]
    %79 = vst [vmem:[#allocation0] sm:%s3] %v78
    %v80 = vld [vmem:[#allocation0] ss:$8 sm:$0xf]
    %v81 = vld [vmem:[#allocation0] ss:$8 sm:$0xf0]
    %vm82 = vcmask 1047556
    %v83 = vsel %vm82, %v81, %v80
    %vm84 = vcmask 64512
    %85 = vst.msk [vmem:[%s1] sm:$0xff] %vm84, %v83
    %s86 = scalar_lea.vmem [#allocation0], 64
    %v87 = vld [vmem:[%s86] ss:$8 sm:$0xf]
    %s88 = scalar_lea.vmem [#allocation0], 64
    %v89 = vld [vmem:[%s88] ss:$8 sm:$0xf0]
    %vm90 = vcmask 1047556
    %v91 = vsel %vm90, %v89, %v87
    %vm92 = vcmask 64512
    %s93 = scalar_lea.vmem %s1, 8
    %94 = vst.msk [vmem:[%s93] sm:$0xff] %vm92, %v91
    %s95 = scalar_lea.vmem [#allocation0], 3
    %v96 = vld [vmem:[%s95] ss:$8 sm:$0xf]
    %s97 = scalar_lea.vmem [#allocation0], 3
    %v98 = vld [vmem:[%s97] ss:$8 sm:$0xf0]
    %vm99 = vcmask 1047556
    %v100 = vsel %vm99, %v98, %v96
    %101 = vrot.lane.b32.xlu0 %v100, 24
    %v102 = vpop.permute.xlu0 %101
    %vm103 = vcmask 261312
    %104 = vst.msk [vmem:[%s1] sm:$0xff] %vm103, %v102
    %s105 = scalar_lea.vmem [#allocation0], 67
    %v106 = vld [vmem:[%s105] ss:$8 sm:$0xf]
    %s107 = scalar_lea.vmem [#allocation0], 67
    %v108 = vld [vmem:[%s107] ss:$8 sm:$0xf0]
    %vm109 = vcmask 1047556
    %v110 = vsel %vm109, %v108, %v106
    %111 = vrot.lane.b32.xlu0 %v110, 24
    %v112 = vpop.permute.xlu0 %111
    %vm113 = vcmask 261312
    %s114 = scalar_lea.vmem %s1, 8
    %115 = vst.msk [vmem:[%s114] sm:$0xff] %vm113, %v112
    %s116 = scalar_lea.vmem [#allocation0], 2
    %v117 = vld [vmem:[%s116] ss:$8 sm:$0xf]
    %s118 = scalar_lea.vmem [#allocation0], 2
    %v119 = vld [vmem:[%s118] ss:$8 sm:$0xf0]
    %vm120 = vcmask 1047556
    %v121 = vsel %vm120, %v119, %v117
    %122 = vrot.lane.b32.xlu0 %v121, 16
    %v123 = vpop.permute.xlu0 %122
    %vm124 = vcmask 195712
    %125 = vst.msk [vmem:[%s1] sm:$0xff] %vm124, %v123
    %s126 = scalar_lea.vmem [#allocation0], 66
    %v127 = vld [vmem:[%s126] ss:$8 sm:$0xf]
    %s128 = scalar_lea.vmem [#allocation0], 66
    %v129 = vld [vmem:[%s128] ss:$8 sm:$0xf0]
    %vm130 = vcmask 1047556
    %v131 = vsel %vm130, %v129, %v127
    %132 = vrot.lane.b32.xlu0 %v131, 16
    %v133 = vpop.permute.xlu0 %132
    %vm134 = vcmask 195712
    %s135 = scalar_lea.vmem %s1, 8
    %136 = vst.msk [vmem:[%s135] sm:$0xff] %vm134, %v133
    %s137 = scalar_lea.vmem [#allocation0], 1
    %v138 = vld [vmem:[%s137] ss:$8 sm:$0xf]
    %s139 = scalar_lea.vmem [#allocation0], 1
    %v140 = vld [vmem:[%s139] ss:$8 sm:$0xf0]
    %vm141 = vcmask 1047556
    %v142 = vsel %vm141, %v140, %v138
    %143 = vrot.lane.b32.xlu0 %v142, 8
    %v144 = vpop.permute.xlu0 %143
    %vm145 = vcmask 130112
    %146 = vst.msk [vmem:[%s1] sm:$0xff] %vm145, %v144
    %s147 = scalar_lea.vmem [#allocation0], 65
    %v148 = vld [vmem:[%s147] ss:$8 sm:$0xf]
    %s149 = scalar_lea.vmem [#allocation0], 65
    %v150 = vld [vmem:[%s149] ss:$8 sm:$0xf0]
    %vm151 = vcmask 1047556
    %v152 = vsel %vm151, %v150, %v148
    %153 = vrot.lane.b32.xlu0 %v152, 8
    %v154 = vpop.permute.xlu0 %153
    %vm155 = vcmask 130112
    %s156 = scalar_lea.vmem %s1, 8
    %157 = vst.msk [vmem:[%s156] sm:$0xff] %vm155, %v154

// kernel: phi_attention_forward.1
$region0: #{phi_attention_forward.1}
  #allocation0 [shape = 'u32[]', space=smem, size = 0x4, offset = 0x4, fixed_abs, tag = 'smem constant byte address 0x4 - core index']
  #allocation1 [shape = 'u32[144,128]{1,0:T(1,128)}', space=vmem, size = 0x12000, scoped, tag = 'internal scratch']
  #allocation2 [shape = 'f32[16,32]{1,0:T(8,128)}', space=vmem, size = 0x2000, scoped, tag = 'scratch operand']
  %s0 = inlined_call_operand.vmem [shape: f32[16,32], index: 0, kind: input, shape index: {}]
  %s1 = inlined_call_operand.vmem [shape: f32[32,112], index: 1, kind: input, shape index: {}]
  %s2 = inlined_call_operand.vmem [shape: f32[1,112], index: 2, kind: input, shape index: {}]
  %s3 = inlined_call_operand.vmem [shape: f32[32,32], index: 3, kind: input, shape index: {}]
  %s4 = inlined_call_operand.vmem [shape: f32[1,32], index: 4, kind: input, shape index: {}]
  %s5 = inlined_call_operand.vmem [shape: f32[16,32], index: 5, kind: input, shape index: {}]
  %s6 = inlined_call_operand.vmem [shape: f32[16,32], index: 6, kind: input, shape index: {}]
  %s7 = inlined_call_operand.vmem [shape: f32[64,32], index: 7, kind: input, shape index: {}]
  %s8 = inlined_call_operand.hbm [shape: f32[16,32], index: 8, kind: output, shape index: {}]
  %s9 = sld [smem:[#allocation0]]
  $region42: #{phi_attention_forward.1} parent=0
    _
  %s11 = ssub.s32 1, %s9
  %s12 = scalar_select 0, %s11, %s9
  $region1: #{phi_attention_forward.1} parent=0
    #allocation3 [shape = 'u8[8192]{0}', space=vmem, size = 0x2000, scoped, tag = 'output window, operand 0, single buffered']
    #allocation4 [shape = 's32[1]{0}', space=sflag, size = 0x4, scoped, tag = 'scoped memory for phi_attention_forward.1']
    %13 = vsyncpa [#allocation4], 0
    // Predicated region
    $region2: #{phi_attention_forward.1} parent=1 // pred_check
      _
    $region3: #{phi_attention_forward.1} parent=1 // pred_check_branch
      %15 = sbr.rel (0) target = $region5
    $region4: #{phi_attention_forward.1} parent=1 // pred_region
      _
    $region5: #{phi_attention_forward.1} parent=1 // pred_fallthru
      _
    // Predicated region
    $region6: #{phi_attention_forward.1} parent=1 // pred_check
      _
    $region7: #{phi_attention_forward.1} parent=1 // pred_check_branch
      %17 = sbr.rel (0) target = $region9
    $region8: #{phi_attention_forward.1} parent=1 // pred_region
      _
    $region9: #{phi_attention_forward.1} parent=1 // pred_fallthru
      _
    // Predicated region
    $region10: #{phi_attention_forward.1} parent=1 // pred_check
      _
    $region11: #{phi_attention_forward.1} parent=1 // pred_check_branch
      %19 = sbr.rel (0) target = $region13
    $region12: #{phi_attention_forward.1} parent=1 // pred_region
      _
    $region13: #{phi_attention_forward.1} parent=1 // pred_fallthru
      _
    // Predicated region
    $region14: #{phi_attention_forward.1} parent=1 // pred_check
      _
    $region15: #{phi_attention_forward.1} parent=1 // pred_check_branch
      %21 = sbr.rel (0) target = $region17
    $region16: #{phi_attention_forward.1} parent=1 // pred_region
      _
    $region17: #{phi_attention_forward.1} parent=1 // pred_fallthru
      _
    // Predicated region
    $region18: #{phi_attention_forward.1} parent=1 // pred_check
      _
    $region19: #{phi_attention_forward.1} parent=1 // pred_check_branch
      %23 = sbr.rel (0) target = $region21
    $region20: #{phi_attention_forward.1} parent=1 // pred_region
      _
    $region21: #{phi_attention_forward.1} parent=1 // pred_fallthru
      _
    // Predicated region
    $region22: #{phi_attention_forward.1} parent=1 // pred_check
      _
    $region23: #{phi_attention_forward.1} parent=1 // pred_check_branch
      %25 = sbr.rel (0) target = $region25
    $region24: #{phi_attention_forward.1} parent=1 // pred_region
      _
    $region25: #{phi_attention_forward.1} parent=1 // pred_fallthru
      _
    // Predicated region
    $region26: #{phi_attention_forward.1} parent=1 // pred_check
      _
    $region27: #{phi_attention_forward.1} parent=1 // pred_check_branch
      %27 = sbr.rel (0) target = $region29
    $region28: #{phi_attention_forward.1} parent=1 // pred_region
      _
    $region29: #{phi_attention_forward.1} parent=1 // pred_fallthru
      _
    // Predicated region
    $region30: #{phi_attention_forward.1} parent=1 // pred_check
      _
    $region31: #{phi_attention_forward.1} parent=1 // pred_check_branch
      %29 = sbr.rel (0) target = $region33
    $region32: #{phi_attention_forward.1} parent=1 // pred_region
      _
    $region33: #{phi_attention_forward.1} parent=1 // pred_fallthru
      _
    %v30 = vld [vmem:[%s0] sm:$0xff]
    %v31 = vld [vmem:[%s0 + $0x8] sm:$0xff]
    %v32 = vld [vmem:[%s1] sm:$0xff]
    %v33 = vld [vmem:[%s1 + $0x8] sm:$0xff]
    %v34 = vld [vmem:[%s1 + $0x10] sm:$0xff]
    %v35 = vld [vmem:[%s1 + $0x18] sm:$0xff]
    %v36 = vld [vmem:[%s2] sm:$0x1]
    %v38 = vlaneseq
    %v39 = vshrl.u32 %v38, 7
    %v40 = vsub.s32 0, %v39
    %v41 = vrot.slane %v36, %v40
    %vm43 = vcmask 261120
    %v45 = vsel %vm43, %v30, 0
    %v48 = vsel %vm43, %v31, 0
    %50 = vmatprep.subr.mxu0 0.0
    %51 = vmatpush1.msra.mxu0 %v32
    %52 = vmatprep.subr.mxu0 0.0
    %53 = vmatpush1.msra.mxu0 %v33
    %54 = vmatprep.subr.mxu0 0.0
    %55 = vmatpush1.msra.mxu0 %v34
    %56 = vmatprep.subr.mxu0 0.0
    %57 = vmatpush1.msra.mxu0 %v35
    %58 = vmatprep.subr.mxu0 0.0
    %59 = vmatpush1.msra.mxu0 0.0
    %60 = vmatprep.subr.mxu0 0.0
    %61 = vmatpush1.msra.mxu0 0.0
    %62 = vmatprep.subr.mxu0 0.0
    %63 = vmatpush1.msra.mxu0 0.0
    %64 = vmatprep.subr.mxu0 0.0
    %65 = vmatpush1.msra.mxu0 0.0
    %66 = vmatprep.subr.mxu0 0.0
    %67 = vmatpush1.msra.mxu0 0.0
    %68 = vmatprep.subr.mxu0 0.0
    %69 = vmatpush1.msra.mxu0 0.0
    %70 = vmatprep.subr.mxu0 0.0
    %71 = vmatpush1.msra.mxu0 0.0
    %72 = vmatprep.subr.mxu0 0.0
    %73 = vmatpush1.msra.mxu0 0.0
    %74 = vmatprep.subr.mxu0 0.0
    %75 = vmatpush1.msra.mxu0 0.0
    %76 = vmatprep.subr.mxu0 0.0
    %77 = vmatpush1.msra.mxu0 0.0
    %78 = vmatprep.subr.mxu0 0.0
    %79 = vmatpush1.msra.mxu0 0.0
    %80 = vmatprep.subr.mxu0 0.0
    %81 = vmatpush1.msra.mxu0 0.0
    %82 = vmatprep.subr.mxu0 0.0
    %83 = vmatpush1.msra.mxu0 0.0
    %84 = vmatprep.subr.mxu0 0.0
    %85 = vmatpush1.msra.mxu0 0.0
    %86 = vmatprep.subr.mxu0 0.0
    %87 = vmatpush1.msra.mxu0 0.0
    %88 = vmatprep.subr.mxu0 0.0
    %89 = vmatpush1.msra.mxu0 0.0
    %90 = vmatprep.subr.mxu0 0.0
    %91 = vmatpush1.msra.mxu0 0.0
    %92 = vmatprep.subr.mxu0 0.0
    %93 = vmatpush1.msra.mxu0 0.0
    %94 = vmatprep.subr.mxu0 0.0
    %95 = vmatpush1.msra.mxu0 0.0
    %96 = vmatprep.subr.mxu0 0.0
    %97 = vmatpush1.msra.mxu0 0.0
    %98 = vmatprep.subr.mxu0 0.0
    %99 = vmatpush1.msra.mxu0 0.0
    %100 = vmatprep.subr.mxu0 0.0
    %101 = vmatpush1.msra.mxu0 0.0
    %102 = vmatprep.subr.mxu0 0.0
    %103 = vmatpush1.msra.mxu0 0.0
    %104 = vmatprep.subr.mxu0 0.0
    %105 = vmatpush1.msra.mxu0 0.0
    %106 = vmatprep.subr.mxu0 0.0
    %107 = vmatpush1.msra.mxu0 0.0
    %108 = vmatprep.subr.mxu0 0.0
    %109 = vmatpush1.msra.mxu0 0.0
    %110 = vmatprep.subr.mxu0 0.0
    %111 = vmatpush1.msra.mxu0 0.0
    %112 = vmatprep.subr.mxu0 0.0
    %113 = vmatpush1.msra.mxu0 0.0
    %114 = vmatprep.mubr.f32.mxu0 0.0
    %115 = vmatmul.mubr.f32.gmra.mrb[0].mxu0 %v45
    %v116 = vpop.f32.mrb[0].mxu0
    %v117 = vadd.f32 %v41, %v116
    %v118 = vpop.f32.mrb[0].mxu0
    %119 = vmatprep.mubr.f32.mxu0 0.0
    %120 = vmatmul.mubr.f32.gmra.mrb[0].mxu0 %v48
    %v121 = vpop.f32.mrb[0].mxu0
    %v122 = vadd.f32 %v41, %v121
    %v123 = vpop.f32.mrb[0].mxu0
    %124 = vdwg.mxu0
    %v125 = vld [vmem:[%s5] sm:$0xff]
    %v126 = vld [vmem:[%s5 + $0x8] sm:$0xff]
    %v127 = vld [vmem:[%s6] sm:$0xff]
    %v128 = vld [vmem:[%s6 + $0x8] sm:$0xff]
    %v129 = vmul.f32 %v117, %v125
    %v130 = vmul.f32 %v122, %v126
    %133 = vrot.lane.b32.xlu0 %v127, 64
    %v134 = vpop.permute.xlu0 %133
    %135 = vrot.lane.b32.xlu0 %v128, 64
    %v136 = vpop.permute.xlu0 %135
    %v139 = vmul.f32 %v117, %v134
    %v140 = vmul.f32 %v122, %v136
    %143 = vrot.lane.b32.xlu0 %v139, 64
    %v144 = vpop.permute.xlu0 %143
    %145 = vrot.lane.b32.xlu0 %v140, 64
    %v146 = vpop.permute.xlu0 %145
    %v149 = vadd.f32 %v129, %v144
    %v150 = vadd.f32 %v130, %v146
    %153 = vrot.lane.b32.xlu0 %v125, 32
    %v154 = vpop.permute.xlu0 %153
    %155 = vrot.lane.b32.xlu0 %v126, 32
    %v156 = vpop.permute.xlu0 %155
    %v159 = vmul.f32 %v117, %v154
    %v160 = vmul.f32 %v122, %v156
    %161 = vrot.lane.b32.xlu0 %v127, 96
    %v162 = vpop.permute.xlu0 %161
    %163 = vrot.lane.b32.xlu0 %v128, 96
    %v164 = vpop.permute.xlu0 %163
    %v167 = vmul.f32 %v117, %v162
    %v168 = vmul.f32 %v122, %v164
    %171 = vrot.lane.b32.xlu0 %v167, 64
    %v172 = vpop.permute.xlu0 %171
    %173 = vrot.lane.b32.xlu0 %v168, 64
    %v174 = vpop.permute.xlu0 %173
    %v177 = vadd.f32 %v159, %v172
    %v178 = vadd.f32 %v160, %v174
    %180 = vrot.lane.b32.xlu0 %v149, 120
    %v181 = vpop.permute.xlu0 %180
    %182 = vrot.lane.b32.xlu0 %v149, 112
    %v183 = vpop.permute.xlu0 %182
    %184 = vrot.lane.b32.xlu0 %v149, 104
    %v185 = vpop.permute.xlu0 %184
    %187 = vrot.lane.b32.xlu0 %v150, 120
    %v188 = vpop.permute.xlu0 %187
    %189 = vrot.lane.b32.xlu0 %v150, 112
    %v190 = vpop.permute.xlu0 %189
    %191 = vrot.lane.b32.xlu0 %v150, 104
    %v192 = vpop.permute.xlu0 %191
    %194 = vrot.lane.b32.xlu0 %v177, 120
    %v195 = vpop.permute.xlu0 %194
    %197 = vrot.lane.b32.xlu0 %v178, 120
    %v198 = vpop.permute.xlu0 %197
    %200 = vrot.lane.b32.xlu0 %v117, 120
    %v201 = vpop.permute.xlu0 %200
    %203 = vrot.lane.b32.xlu0 %v122, 120
    %v204 = vpop.permute.xlu0 %203
    %v205 = vld [vmem:[%s7] sm:$0xff]
    %v206 = vld [vmem:[%s7 + $0x8] sm:$0xff]
    %v207 = vld [vmem:[%s7 + $0x10] sm:$0xff]
    %v208 = vld [vmem:[%s7 + $0x18] sm:$0xff]
    %v209 = vld [vmem:[%s7 + $0x20] sm:$0xff]
    %v210 = vld [vmem:[%s7 + $0x28] sm:$0xff]
    %v211 = vld [vmem:[%s7 + $0x30] sm:$0xff]
    %v212 = vld [vmem:[%s7 + $0x38] sm:$0xff]
    %213 = vrot.lane.b32.xlu0 %v177, 96
    %v214 = vpop.permute.xlu0 %213
    %215 = vrot.lane.b32.xlu0 %v195, 96
    %v216 = vpop.permute.xlu0 %215
    %217 = vrot.lane.b32.xlu0 %v178, 96
    %v218 = vpop.permute.xlu0 %217
    %219 = vrot.lane.b32.xlu0 %v198, 96
    %v220 = vpop.permute.xlu0 %219
    %vm221 = vcmask 64512
    %v222 = vsel %vm221, %v149, 0
    %v224 = vsel %vm221, %v181, 0
    %v226 = vsel %vm221, %v183, 0
    %v228 = vsel %vm221, %v185, 0
    %v230 = vsel %vm221, %v150, 0
    %v232 = vsel %vm221, %v188, 0
    %v234 = vsel %vm221, %v190, 0
    %v236 = vsel %vm221, %v192, 0
    %v238 = vsel %vm221, %v214, 0
    %v240 = vsel %vm221, %v216, 0
    %v242 = vsel %vm221, %v218, 0
    %v244 = vsel %vm221, %v220, 0
    %246 = vmatprep.subr.mxu0 0.0
    %247 = vmatpush1.xpose.msra.mxu0 %v238
    %248 = vmatprep.subr.mxu0 0.0
    %249 = vmatpush1.xpose.msra.mxu0 %v240
    %250 = vmatprep.subr.mxu0 0.0
    %251 = vmatpush1.xpose.msra.mxu0 %v242
    %252 = vmatprep.subr.mxu0 0.0
    %253 = vmatpush1.xpose.msra.mxu0 %v244
    %254 = vmatprep.subr.mxu0 0.0
    %255 = vmatpush1.xpose.msra.mxu0 0.0
    %256 = vmatprep.subr.mxu0 0.0
    %257 = vmatpush1.xpose.msra.mxu0 0.0
    %258 = vmatprep.subr.mxu0 0.0
    %259 = vmatpush1.xpose.msra.mxu0 0.0
    %260 = vmatprep.subr.mxu0 0.0
    %261 = vmatpush1.xpose.msra.mxu0 0.0
    %262 = vmatprep.subr.mxu0 0.0
    %263 = vmatpush1.xpose.msra.mxu0 0.0
    %264 = vmatprep.subr.mxu0 0.0
    %265 = vmatpush1.xpose.msra.mxu0 0.0
    %266 = vmatprep.subr.mxu0 0.0
    %267 = vmatpush1.xpose.msra.mxu0 0.0
    %268 = vmatprep.subr.mxu0 0.0
    %269 = vmatpush1.xpose.msra.mxu0 0.0
    %270 = vmatprep.subr.mxu0 0.0
    %271 = vmatpush1.xpose.msra.mxu0 0.0
    %272 = vmatprep.subr.mxu0 0.0
    %273 = vmatpush1.xpose.msra.mxu0 0.0
    %274 = vmatprep.subr.mxu0 0.0
    %275 = vmatpush1.xpose.msra.mxu0 0.0
    %276 = vmatprep.subr.mxu0 0.0
    %277 = vmatpush1.xpose.msra.mxu0 0.0
    %278 = vmatprep.subr.mxu0 0.0
    %279 = vmatpush1.xpose.msra.mxu0 0.0
    %280 = vmatprep.subr.mxu0 0.0
    %281 = vmatpush1.xpose.msra.mxu0 0.0
    %282 = vmatprep.subr.mxu0 0.0
    %283 = vmatpush1.xpose.msra.mxu0 0.0
    %284 = vmatprep.subr.mxu0 0.0
    %285 = vmatpush1.xpose.msra.mxu0 0.0
    %286 = vmatprep.subr.mxu0 0.0
    %287 = vmatpush1.xpose.msra.mxu0 0.0
    %288 = vmatprep.subr.mxu0 0.0
    %289 = vmatpush1.xpose.msra.mxu0 0.0
    %290 = vmatprep.subr.mxu0 0.0
    %291 = vmatpush1.xpose.msra.mxu0 0.0
    %292 = vmatprep.subr.mxu0 0.0
    %293 = vmatpush1.xpose.msra.mxu0 0.0
    %294 = vmatprep.subr.mxu0 0.0
    %295 = vmatpush1.xpose.msra.mxu0 0.0
    %296 = vmatprep.subr.mxu0 0.0
    %297 = vmatpush1.xpose.msra.mxu0 0.0
    %298 = vmatprep.subr.mxu0 0.0
    %299 = vmatpush1.xpose.msra.mxu0 0.0
    %300 = vmatprep.subr.mxu0 0.0
    %301 = vmatpush1.xpose.msra.mxu0 0.0
    %302 = vmatprep.subr.mxu0 0.0
    %303 = vmatpush1.xpose.msra.mxu0 0.0
    %304 = vmatprep.subr.mxu0 0.0
    %305 = vmatpush1.xpose.msra.mxu0 0.0
    %306 = vmatprep.subr.mxu0 0.0
    %307 = vmatpush1.xpose.msra.mxu0 0.0
    %308 = vmatprep.subr.mxu0 0.0
    %309 = vmatpush1.xpose.msra.mxu0 0.0
    %310 = vmatprep.mubr.f32.mxu0 0.0
    %311 = vmatmul.mubr.f32.gmra.mrb[0].mxu0 %v222
    %v312 = vpop.f32.mrb[0].mxu0
    %v313 = vadd.f32 %v205, %v312
    %v314 = vpop.f32.mrb[0].mxu0
    %315 = vmatprep.mubr.f32.mxu0 0.0
    %316 = vmatmul.mubr.f32.gmra.mrb[0].mxu0 %v224
    %v317 = vpop.f32.mrb[0].mxu0
    %v318 = vadd.f32 %v206, %v317
    %v319 = vpop.f32.mrb[0].mxu0
    %320 = vmatprep.mubr.f32.mxu0 0.0
    %321 = vmatmul.mubr.f32.gmra.mrb[0].mxu0 %v226
    %v322 = vpop.f32.mrb[0].mxu0
    %v323 = vadd.f32 %v207, %v322
    %v324 = vpop.f32.mrb[0].mxu0
    %325 = vmatprep.mubr.f32.mxu0 0.0
    %326 = vmatmul.mubr.f32.gmra.mrb[0].mxu0 %v228
    %v327 = vpop.f32.mrb[0].mxu0
    %v328 = vadd.f32 %v208, %v327
    %v329 = vpop.f32.mrb[0].mxu0
    %330 = vmatprep.mubr.f32.mxu0 0.0
    %331 = vmatmul.mubr.f32.gmra.mrb[0].mxu0 %v230
    %v332 = vpop.f32.mrb[0].mxu0
    %v333 = vadd.f32 %v209, %v332
    %v334 = vpop.f32.mrb[0].mxu0
    %335 = vmatprep.mubr.f32.mxu0 0.0
    %336 = vmatmul.mubr.f32.gmra.mrb[0].mxu0 %v232
    %v337 = vpop.f32.mrb[0].mxu0
    %v338 = vadd.f32 %v210, %v337
    %v339 = vpop.f32.mrb[0].mxu0
    %340 = vmatprep.mubr.f32.mxu0 0.0
    %341 = vmatmul.mubr.f32.gmra.mrb[0].mxu0 %v234
    %v342 = vpop.f32.mrb[0].mxu0
    %v343 = vadd.f32 %v211, %v342
    %v344 = vpop.f32.mrb[0].mxu0
    %345 = vmatprep.mubr.f32.mxu0 0.0
    %346 = vmatmul.mubr.f32.gmra.mrb[0].mxu0 %v236
    %v347 = vpop.f32.mrb[0].mxu0
    %v348 = vadd.f32 %v212, %v347
    %v349 = vpop.f32.mrb[0].mxu0
    %350 = vdwg.mxu0
    %v351 = vsel %vm43, %v313, -inf
    %352 = vmax.xlane.f32.xlu0 %v351
    %v353 = vpop.xlane.xlu0 %352
    %v354 = vsel %vm43, %v318, -inf
    %355 = vmax.xlane.f32.xlu0 %v354
    %v356 = vpop.xlane.xlu0 %355
    %v357 = vsel %vm43, %v323, -inf
    %358 = vmax.xlane.f32.xlu0 %v357
    %v359 = vpop.xlane.xlu0 %358
    %v360 = vsel %vm43, %v328, -inf
    %361 = vmax.xlane.f32.xlu0 %v360
    %v362 = vpop.xlane.xlu0 %361
    %v363 = vsel %vm43, %v333, -inf
    %364 = vmax.xlane.f32.xlu0 %v363
    %v365 = vpop.xlane.xlu0 %364
    %v366 = vsel %vm43, %v338, -inf
    %367 = vmax.xlane.f32.xlu0 %v366
    %v368 = vpop.xlane.xlu0 %367
    %v369 = vsel %vm43, %v343, -inf
    %370 = vmax.xlane.f32.xlu0 %v369
    %v371 = vpop.xlane.xlu0 %370
    %v372 = vsel %vm43, %v348, -inf
    %373 = vmax.xlane.f32.xlu0 %v372
    %v374 = vpop.xlane.xlu0 %373
    %v375 = vsub.f32 %v313, %v353
    %v376 = vsub.f32 %v318, %v356
    %v377 = vsub.f32 %v323, %v359
    %v378 = vsub.f32 %v328, %v362
    %v379 = vsub.f32 %v333, %v365
    %v380 = vsub.f32 %v338, %v368
    %v381 = vsub.f32 %v343, %v371
    %v382 = vsub.f32 %v348, %v374
    %v383 = vmul.f32 %v375, 1.442695
    %v384 = vpow.pop %v383
    %v385 = vmul.f32 %v376, 1.442695
    %v386 = vpow.pop %v385
    %v387 = vmul.f32 %v377, 1.442695
    %v388 = vpow.pop %v387
    %v389 = vmul.f32 %v378, 1.442695
    %v390 = vpow.pop %v389
    %v391 = vmul.f32 %v379, 1.442695
    %v392 = vpow.pop %v391
    %v393 = vmul.f32 %v380, 1.442695
    %v394 = vpow.pop %v393
    %v395 = vmul.f32 %v381, 1.442695
    %v396 = vpow.pop %v395
    %v397 = vmul.f32 %v382, 1.442695
    %v398 = vpow.pop %v397
    %v399 = vsel %vm43, %v384, 0.0
    %400 = vadd.xlane.f32.xlu0 %v399
    %v401 = vpop.xlane.xlu0 %400
    %v402 = vsel %vm43, %v386, 0.0
    %403 = vadd.xlane.f32.xlu0 %v402
    %v404 = vpop.xlane.xlu0 %403
    %v405 = vsel %vm43, %v388, 0.0
    %406 = vadd.xlane.f32.xlu0 %v405
    %v407 = vpop.xlane.xlu0 %406
    %v408 = vsel %vm43, %v390, 0.0
    %409 = vadd.xlane.f32.xlu0 %v408
    %v410 = vpop.xlane.xlu0 %409
    %v411 = vsel %vm43, %v392, 0.0
    %412 = vadd.xlane.f32.xlu0 %v411
    %v413 = vpop.xlane.xlu0 %412
    %v414 = vsel %vm43, %v394, 0.0
    %415 = vadd.xlane.f32.xlu0 %v414
    %v416 = vpop.xlane.xlu0 %415
    %v417 = vsel %vm43, %v396, 0.0
    %418 = vadd.xlane.f32.xlu0 %v417
    %v419 = vpop.xlane.xlu0 %418
    %v420 = vsel %vm43, %v398, 0.0
    %421 = vadd.xlane.f32.xlu0 %v420
    %v422 = vpop.xlane.xlu0 %421
    %v423 = vrcp.pop %v401
    %v424 = vmul.f32 %v384, %v423
    %v425 = vrcp.pop %v404
    %v426 = vmul.f32 %v386, %v425
    %v427 = vrcp.pop %v407
    %v428 = vmul.f32 %v388, %v427
    %v429 = vrcp.pop %v410
    %v430 = vmul.f32 %v390, %v429
    %v431 = vrcp.pop %v413
    %v432 = vmul.f32 %v392, %v431
    %v433 = vrcp.pop %v416
    %v434 = vmul.f32 %v394, %v433
    %v435 = vrcp.pop %v419
    %v436 = vmul.f32 %v396, %v435
    %v437 = vrcp.pop %v422
    %v438 = vmul.f32 %v398, %v437
    %439 = vrot.lane.b32.xlu0 %v117, 80
    %v440 = vpop.permute.xlu0 %439
    %441 = vrot.lane.b32.xlu0 %v201, 80
    %v442 = vpop.permute.xlu0 %441
    %443 = vrot.lane.b32.xlu0 %v122, 80
    %v444 = vpop.permute.xlu0 %443
    %445 = vrot.lane.b32.xlu0 %v204, 80
    %v446 = vpop.permute.xlu0 %445
    %v452 = vsel %vm43, %v424, 0
    %v455 = vsel %vm43, %v426, 0
    %v458 = vsel %vm43, %v428, 0
    %v461 = vsel %vm43, %v430, 0
    %v464 = vsel %vm43, %v432, 0
    %v467 = vsel %vm43, %v434, 0
    %v470 = vsel %vm43, %v436, 0
    %v473 = vsel %vm43, %v438, 0
    %475 = vmatprep.subr.mxu0 0.0
    %476 = vmatpush1.msra.mxu0 %v440
    %477 = vmatprep.subr.mxu0 0.0
    %478 = vmatpush1.msra.mxu0 %v442
    %479 = vmatprep.subr.mxu0 0.0
    %480 = vmatpush1.msra.mxu0 %v444
    %481 = vmatprep.subr.mxu0 0.0
    %482 = vmatpush1.msra.mxu0 %v446
    %483 = vmatprep.subr.mxu0 0.0
    %484 = vmatpush1.msra.mxu0 0.0
    %485 = vmatprep.subr.mxu0 0.0
    %486 = vmatpush1.msra.mxu0 0.0
    %487 = vmatprep.subr.mxu0 0.0
    %488 = vmatpush1.msra.mxu0 0.0
    %489 = vmatprep.subr.mxu0 0.0
    %490 = vmatpush1.msra.mxu0 0.0
    %491 = vmatprep.subr.mxu0 0.0
    %492 = vmatpush1.msra.mxu0 0.0
    %493 = vmatprep.subr.mxu0 0.0
    %494 = vmatpush1.msra.mxu0 0.0
    %495 = vmatprep.subr.mxu0 0.0
    %496 = vmatpush1.msra.mxu0 0.0
    %497 = vmatprep.subr.mxu0 0.0
    %498 = vmatpush1.msra.mxu0 0.0
    %499 = vmatprep.subr.mxu0 0.0
    %500 = vmatpush1.msra.mxu0 0.0
    %501 = vmatprep.subr.mxu0 0.0
    %502 = vmatpush1.msra.mxu0 0.0
    %503 = vmatprep.subr.mxu0 0.0
    %504 = vmatpush1.msra.mxu0 0.0
    %505 = vmatprep.subr.mxu0 0.0
    %506 = vmatpush1.msra.mxu0 0.0
    %507 = vmatprep.subr.mxu0 0.0
    %508 = vmatpush1.msra.mxu0 0.0
    %509 = vmatprep.subr.mxu0 0.0
    %510 = vmatpush1.msra.mxu0 0.0
    %511 = vmatprep.subr.mxu0 0.0
    %512 = vmatpush1.msra.mxu0 0.0
    %513 = vmatprep.subr.mxu0 0.0
    %514 = vmatpush1.msra.mxu0 0.0
    %515 = vmatprep.subr.mxu0 0.0
    %516 = vmatpush1.msra.mxu0 0.0
    %517 = vmatprep.subr.mxu0 0.0
    %518 = vmatpush1.msra.mxu0 0.0
    %519 = vmatprep.subr.mxu0 0.0
    %520 = vmatpush1.msra.mxu0 0.0
    %521 = vmatprep.subr.mxu0 0.0
    %522 = vmatpush1.msra.mxu0 0.0
    %523 = vmatprep.subr.mxu0 0.0
    %524 = vmatpush1.msra.mxu0 0.0
    %525 = vmatprep.subr.mxu0 0.0
    %526 = vmatpush1.msra.mxu0 0.0
    %527 = vmatprep.subr.mxu0 0.0
    %528 = vmatpush1.msra.mxu0 0.0
    %529 = vmatprep.subr.mxu0 0.0
    %530 = vmatpush1.msra.mxu0 0.0
    %531 = vmatprep.subr.mxu0 0.0
    %532 = vmatpush1.msra.mxu0 0.0
    %533 = vmatprep.subr.mxu0 0.0
    %534 = vmatpush1.msra.mxu0 0.0
    %535 = vmatprep.subr.mxu0 0.0
    %536 = vmatpush1.msra.mxu0 0.0
    %537 = vmatprep.subr.mxu0 0.0
    %538 = vmatpush1.msra.mxu0 0.0
    %539 = vmatprep.mubr.f32.mxu0 0.0
    %540 = vmatmul.mubr.f32.gmra.mrb[0].mxu0 %v452
    %v541 = vpop.f32.mrb[0].mxu0
    %v542 = vadd.f32 0.0, %v541
    %v543 = vpop.f32.mrb[0].mxu0
    %544 = vmatprep.mubr.f32.mxu0 0.0
    %545 = vmatmul.mubr.f32.gmra.mrb[0].mxu0 %v455
    %v546 = vpop.f32.mrb[0].mxu0
    %v547 = vadd.f32 0.0, %v546
    %v548 = vpop.f32.mrb[0].mxu0
    %549 = vmatprep.mubr.f32.mxu0 0.0
    %550 = vmatmul.mubr.f32.gmra.mrb[0].mxu0 %v458
    %v551 = vpop.f32.mrb[0].mxu0
    %v552 = vadd.f32 0.0, %v551
    %v553 = vpop.f32.mrb[0].mxu0
    %554 = vmatprep.mubr.f32.mxu0 0.0
    %555 = vmatmul.mubr.f32.gmra.mrb[0].mxu0 %v461
    %v556 = vpop.f32.mrb[0].mxu0
    %v557 = vadd.f32 0.0, %v556
    %v558 = vpop.f32.mrb[0].mxu0
    %559 = vmatprep.mubr.f32.mxu0 0.0
    %560 = vmatmul.mubr.f32.gmra.mrb[0].mxu0 %v464
    %v561 = vpop.f32.mrb[0].mxu0
    %v562 = vadd.f32 0.0, %v561
    %v563 = vpop.f32.mrb[0].mxu0
    %564 = vmatprep.mubr.f32.mxu0 0.0
    %565 = vmatmul.mubr.f32.gmra.mrb[0].mxu0 %v467
    %v566 = vpop.f32.mrb[0].mxu0
    %v567 = vadd.f32 0.0, %v566
    %v568 = vpop.f32.mrb[0].mxu0
    %569 = vmatprep.mubr.f32.mxu0 0.0
    %570 = vmatmul.mubr.f32.gmra.mrb[0].mxu0 %v470
    %v571 = vpop.f32.mrb[0].mxu0
    %v572 = vadd.f32 0.0, %v571
    %v573 = vpop.f32.mrb[0].mxu0
    %574 = vmatprep.mubr.f32.mxu0 0.0
    %575 = vmatmul.mubr.f32.gmra.mrb[0].mxu0 %v473
    %v576 = vpop.f32.mrb[0].mxu0
    %v577 = vadd.f32 0.0, %v576
    %v578 = vpop.f32.mrb[0].mxu0
    %579 = vdwg.mxu0
    %580 = vst.msk [vmem:[#allocation2] sm:$0xff] %vm221, %v542
    %582 = vrot.lane.b32.xlu0 %v547, 8
    %v583 = vpop.permute.xlu0 %582
    %vm585 = vcmask 130112
    %586 = vst.msk [vmem:[#allocation2] sm:$0xff] %vm585, %v583
    %588 = vrot.lane.b32.xlu0 %v552, 16
    %v589 = vpop.permute.xlu0 %588
    %vm591 = vcmask 195712
    %592 = vst.msk [vmem:[#allocation2] sm:$0xff] %vm591, %v589
    %594 = vrot.lane.b32.xlu0 %v557, 24
    %v595 = vpop.permute.xlu0 %594
    %vm597 = vcmask 261312
    %598 = vst.msk [vmem:[#allocation2] sm:$0xff] %vm597, %v595
    %599 = vst.msk [vmem:[#allocation2 + $0x8] sm:$0xff] %vm221, %v562
    %601 = vrot.lane.b32.xlu0 %v567, 8
    %v602 = vpop.permute.xlu0 %601
    %604 = vst.msk [vmem:[#allocation2 + $0x8] sm:$0xff] %vm585, %v602
    %606 = vrot.lane.b32.xlu0 %v572, 16
    %v607 = vpop.permute.xlu0 %606
    %609 = vst.msk [vmem:[#allocation2 + $0x8] sm:$0xff] %vm591, %v607
    %611 = vrot.lane.b32.xlu0 %v577, 24
    %v612 = vpop.permute.xlu0 %611
    %614 = vst.msk [vmem:[#allocation2 + $0x8] sm:$0xff] %vm597, %v612
    %v615 = vld [vmem:[#allocation2] sm:$0xff]
    %v616 = vld [vmem:[#allocation2 + $0x8] sm:$0xff]
    %v617 = vld [vmem:[%s3] sm:$0xff]
    %v618 = vld [vmem:[%s3 + $0x8] sm:$0xff]
    %v619 = vld [vmem:[%s3 + $0x10] sm:$0xff]
    %v620 = vld [vmem:[%s3 + $0x18] sm:$0xff]
    %v621 = vld [vmem:[%s4] sm:$0x1]
    %v623 = vlaneseq
    %v624 = vshrl.u32 %v623, 7
    %v625 = vsub.s32 0, %v624
    %v626 = vrot.slane %v621, %v625
    %v629 = vsel %vm43, %v615, 0
    %v632 = vsel %vm43, %v616, 0
    %634 = vmatprep.subr.mxu0 0.0
    %635 = vmatpush1.msra.mxu0 %v617
    %636 = vmatprep.subr.mxu0 0.0
    %637 = vmatpush1.msra.mxu0 %v618
    %638 = vmatprep.subr.mxu0 0.0
    %639 = vmatpush1.msra.mxu0 %v619
    %640 = vmatprep.subr.mxu0 0.0
    %641 = vmatpush1.msra.mxu0 %v620
    %642 = vmatprep.subr.mxu0 0.0
    %643 = vmatpush1.msra.mxu0 0.0
    %644 = vmatprep.subr.mxu0 0.0
    %645 = vmatpush1.msra.mxu0 0.0
    %646 = vmatprep.subr.mxu0 0.0
    %647 = vmatpush1.msra.mxu0 0.0
    %648 = vmatprep.subr.mxu0 0.0
    %649 = vmatpush1.msra.mxu0 0.0
    %650 = vmatprep.subr.mxu0 0.0
    %651 = vmatpush1.msra.mxu0 0.0
    %652 = vmatprep.subr.mxu0 0.0
    %653 = vmatpush1.msra.mxu0 0.0
    %654 = vmatprep.subr.mxu0 0.0
    %655 = vmatpush1.msra.mxu0 0.0
    %656 = vmatprep.subr.mxu0 0.0
    %657 = vmatpush1.msra.mxu0 0.0
    %658 = vmatprep.subr.mxu0 0.0
    %659 = vmatpush1.msra.mxu0 0.0
    %660 = vmatprep.subr.mxu0 0.0
    %661 = vmatpush1.msra.mxu0 0.0
    %662 = vmatprep.subr.mxu0 0.0
    %663 = vmatpush1.msra.mxu0 0.0
    %664 = vmatprep.subr.mxu0 0.0
    %665 = vmatpush1.msra.mxu0 0.0
    %666 = vmatprep.subr.mxu0 0.0
    %667 = vmatpush1.msra.mxu0 0.0
    %668 = vmatprep.subr.mxu0 0.0
    %669 = vmatpush1.msra.mxu0 0.0
    %670 = vmatprep.subr.mxu0 0.0
    %671 = vmatpush1.msra.mxu0 0.0
    %672 = vmatprep.subr.mxu0 0.0
    %673 = vmatpush1.msra.mxu0 0.0
    %674 = vmatprep.subr.mxu0 0.0
    %675 = vmatpush1.msra.mxu0 0.0
    %676 = vmatprep.subr.mxu0 0.0
    %677 = vmatpush1.msra.mxu0 0.0
    %678 = vmatprep.subr.mxu0 0.0
    %679 = vmatpush1.msra.mxu0 0.0
    %680 = vmatprep.subr.mxu0 0.0
    %681 = vmatpush1.msra.mxu0 0.0
    %682 = vmatprep.subr.mxu0 0.0
    %683 = vmatpush1.msra.mxu0 0.0
    %684 = vmatprep.subr.mxu0 0.0
    %685 = vmatpush1.msra.mxu0 0.0
    %686 = vmatprep.subr.mxu0 0.0
    %687 = vmatpush1.msra.mxu0 0.0
    %688 = vmatprep.subr.mxu0 0.0
    %689 = vmatpush1.msra.mxu0 0.0
    %690 = vmatprep.subr.mxu0 0.0
    %691 = vmatpush1.msra.mxu0 0.0
    %692 = vmatprep.subr.mxu0 0.0
    %693 = vmatpush1.msra.mxu0 0.0
    %694 = vmatprep.subr.mxu0 0.0
    %695 = vmatpush1.msra.mxu0 0.0
    %696 = vmatprep.subr.mxu0 0.0
    %697 = vmatpush1.msra.mxu0 0.0
    %698 = vmatprep.mubr.f32.mxu0 0.0
    %699 = vmatmul.mubr.f32.gmra.mrb[0].mxu0 %v629
    %v700 = vpop.f32.mrb[0].mxu0
    %v701 = vadd.f32 %v626, %v700
    %v702 = vpop.f32.mrb[0].mxu0
    %703 = vmatprep.mubr.f32.mxu0 0.0
    %704 = vmatmul.mubr.f32.gmra.mrb[0].mxu0 %v632
    %v705 = vpop.f32.mrb[0].mxu0
    %v706 = vadd.f32 %v626, %v705
    %v707 = vpop.f32.mrb[0].mxu0
    %708 = vdwg.mxu0
    %709 = vst.msk [vmem:[#allocation3] sm:$0xff] %vm43, %v701
    %710 = vst.msk [vmem:[#allocation3 + $0x8] sm:$0xff] %vm43, %v706
    // Predicated region
    $region34: #{phi_attention_forward.1} parent=1 // pred_check
      _
    $region35: #{phi_attention_forward.1} parent=1 // pred_check_branch
      %712 = sbr.rel (0) target = $region37
    $region36: #{phi_attention_forward.1} parent=1 // pred_region
      %s714 = ssub.s32 256, 256
      %715 = vsyncadd [#allocation4], %s714
      %s716 = sshll.u32 [#allocation3], 4
      %s717 = int_to_ptr.vmem [resolvable:$true] %s716
      %722 = dma.vmem_to_hbm [thread:$0]  %s717, 256, %s8, [#allocation4], 128, 128, 8
    $region37: #{phi_attention_forward.1} parent=1 // pred_fallthru
      _
    // Predicated region
    $region38: #{phi_attention_forward.1} parent=1 // pred_check
      _
    $region39: #{phi_attention_forward.1} parent=1 // pred_check_branch
      %724 = sbr.rel (0) target = $region41
    $region40: #{phi_attention_forward.1} parent=1 // pred_region
      %725 = dma.done [#allocation4], 256
    $region41: #{phi_attention_forward.1} parent=1 // pred_fallthru
      _
    %726 = vsyncpa [#allocation4], 1

</llo_original>
